<compile_context>
chip_gen: v7x
topology: tpu7x:2x2x1
jax: 0.10.0
libtpu: 0.0.40
codegen_flags: <defaults>
</compile_context>

<pallas_src>
import functools

import jax
import jax.numpy as jnp
from jax.experimental import pallas as pl
from jax.experimental.pallas import tpu as pltpu

# Model / problem configuration (small, consistent with the module).
FILTER_SIZES = (3, 4, 5)   # cfg.FILTER_SIZE
FILTER_NUM = 8             # cfg.FILTER_NUM
EMBEDDING_DIM = 32         # cfg.EMBEDDING_DIM
VOCAB_SIZE = 50            # cfg.VOCABULARY_SIZE
CLASS_NUM = 3
SEQ_LEN = 16
BATCH = 2

LANE = 128                 # lane-dense padding for the small N dims (3*F=24, C=3)


def _textcnn_kernel(max_s, t_max,
                    emb_ref, w_ref, b_ref, mask_ref, fc_wT_ref, fc_b_ref,
                    out_ref):
    """Fused TextCNN forward.

    emb_ref   : (B, L_pad, E)    zero-padded embeddings (pad along L)
    w_ref     : (max_s*E, LANE)  all conv filter banks fused + lane-padded
    b_ref     : (1, LANE)        fused conv biases (zero in padded columns)
    mask_ref  : (t_max, LANE)    1.0 on valid (t, filter) positions, else 0.0
    fc_wT_ref : (LANE, LANE)     final linear weight (transposed, zero-padded)
    fc_b_ref  : (1, LANE)
    out_ref   : (B, LANE)        lane-dense logits (real classes in [:CLASS_NUM])
    """
    emb = emb_ref[...]                                   # (B, L_pad, E) f32
    B, _, E = emb.shape

    # In-kernel im2col: one max_s-wide window per valid temporal position.
    windows = jnp.concatenate(
        [emb[:, k:k + t_max, :] for k in range(max_s)], axis=-1)   # (B, T, s*E)
    windows = windows.reshape(B * t_max, max_s * E)

    # Single MXU matmul covering all three filter banks at once.
    z = jnp.dot(windows, w_ref[...], preferred_element_type=jnp.float32)
    z = jnp.maximum(z + b_ref[...], 0.0)                 # conv bias + ReLU
    z = z.reshape(B, t_max, LANE) * mask_ref[...][None]  # zero invalid positions
    pooled = jnp.max(z, axis=1)                          # max_pool1d over time (B, LANE)

    # TODO(synk): dropout is identity in eval mode; training-mode dropout omitted.
    logits = jnp.dot(pooled, fc_wT_ref[...],
                     preferred_element_type=jnp.float32) + fc_b_ref[...]
    out_ref[...] = logits.astype(out_ref.dtype)


def textcnn_forward(emb, conv_ws, conv_bs, fc_w, fc_b, filter_sizes):
    """emb: (B, L, E) f32 embeddings.
    conv_ws[i]: (F, s_i, E)  (PyTorch weight with channel dim squeezed)
    conv_bs[i]: (F,)    fc_w: (C, n*F)   fc_b: (C,)"""
    B, L, E = emb.shape
    n = len(filter_sizes)
    Fn = conv_ws[0].shape[0]
    min_s, max_s = min(filter_sizes), max(filter_sizes)
    t_max = L - min_s + 1                 # temporal positions for the smallest filter
    l_pad = t_max + max_s - 1             # rows needed for full max_s-wide windows

    # Zero-pad the sequence; out-of-range taps are neutralized by zero weight
    # rows (per filter) and the validity mask before the temporal max.
    emb_pad = jnp.zeros((B, l_pad, E), emb.dtype).at[:, :L, :].set(emb)

    # Fused, lane-padded conv weights / bias: filter bank i occupies columns
    # [i*F, (i+1)*F); rows beyond s_i*E stay zero.
    w_fused = jnp.zeros((max_s * E, LANE), jnp.float32)
    b_fused = jnp.zeros((1, LANE), jnp.float32)
    mask = jnp.ones((t_max, LANE), jnp.float32)
    for i, (s, w, b) in enumerate(zip(filter_sizes, conv_ws, conv_bs)):
        w_block = jnp.transpose(w, (1, 2, 0)).reshape(s * E, Fn)   # (s*E, F)
        w_fused = w_fused.at[:s * E, i * Fn:(i + 1) * Fn].set(w_block)
        b_fused = b_fused.at[0, i * Fn:(i + 1) * Fn].set(b)
        mask = mask.at[L - s + 1:, i * Fn:(i + 1) * Fn].set(0.0)

    # Lane-padded final linear (extra rows/cols are zero -> no contribution).
    fc_wT = jnp.zeros((LANE, LANE), jnp.float32).at[:n * Fn, :CLASS_NUM].set(fc_w.T)
    fc_bp = jnp.zeros((1, LANE), jnp.float32).at[0, :CLASS_NUM].set(fc_b)

    vmem = pl.BlockSpec(memory_space=pltpu.MemorySpace.VMEM)
    kernel = functools.partial(_textcnn_kernel, max_s, t_max)
    logits_pad = pl.pallas_call(
        kernel,
        out_shape=jax.ShapeDtypeStruct((B, LANE), jnp.float32),
        in_specs=[vmem] * 6,
        out_specs=vmem,
    )(emb_pad, w_fused, b_fused, mask, fc_wT, fc_bp)
    return logits_pad[:, :CLASS_NUM]


def ref_forward(emb, conv_ws, conv_bs, fc_w, fc_b, filter_sizes):
    """Pure-JAX reference reproducing the PyTorch forward."""
    B, L, E = emb.shape
    feats = []
    for s, w, b in zip(filter_sizes, conv_ws, conv_bs):
        Fn = w.shape[0]
        outs = []
        for t in range(L - s + 1):
            window = emb[:, t:t + s, :].reshape(B, s * E)
            outs.append(window @ w.reshape(Fn, s * E).T + b)
        y = jax.nn.relu(jnp.stack(outs, axis=2))      # (B, F, T)
        feats.append(jnp.max(y, axis=2))              # max_pool1d + squeeze
    x = jnp.concatenate(feats, axis=1)
    return x @ fc_w.T + fc_b


if __name__ == "__main__":
    key = jax.random.PRNGKey(0)
    keys = jax.random.split(key, 11)

    # Token ids and parameters (deterministic, in-script init).
    tokens = jax.random.randint(keys[0], (BATCH, SEQ_LEN), 0, VOCAB_SIZE)
    emb_table = 0.1 * jax.random.normal(
        keys[1], (VOCAB_SIZE, EMBEDDING_DIM), jnp.float32)

    conv_ws, conv_bs = [], []
    for i, s in enumerate(FILTER_SIZES):
        conv_ws.append(0.1 * jax.random.normal(
            keys[2 + 2 * i], (FILTER_NUM, s, EMBEDDING_DIM), jnp.float32))
        conv_bs.append(0.1 * jax.random.normal(
            keys[3 + 2 * i], (FILTER_NUM,), jnp.float32))
    fc_w = 0.1 * jax.random.normal(
        keys[2 + 2 * len(FILTER_SIZES)],
        (CLASS_NUM, len(FILTER_SIZES) * FILTER_NUM), jnp.float32)
    fc_b = 0.1 * jax.random.normal(
        keys[3 + 2 * len(FILTER_SIZES)], (CLASS_NUM,), jnp.float32)

    # Embedding lookup (gather) is glue, done in plain JAX.
    emb = jnp.take(emb_table, tokens, axis=0)         # (B, L, E)

    logits = textcnn_forward(emb, conv_ws, conv_bs, fc_w, fc_b, FILTER_SIZES)
    logits = jax.block_until_ready(logits)

    ref = ref_forward(emb, conv_ws, conv_bs, fc_w, fc_b, FILTER_SIZES)
    assert logits.shape == (BATCH, CLASS_NUM)
    assert jnp.allclose(logits, ref, atol=1e-4, rtol=1e-4), (logits, ref)
    print("KERNEL_OK")
</pallas_src>

<mosaic_0001>
module attributes {stable_mosaic.version = 11 : i64} {
  func.func @_textcnn_kernel(%arg0: memref<2x18x32xf32, #tpu.memory_space<vmem>>, %arg1: memref<160x128xf32, #tpu.memory_space<vmem>>, %arg2: memref<1x128xf32, #tpu.memory_space<vmem>>, %arg3: memref<14x128xf32, #tpu.memory_space<vmem>>, %arg4: memref<128x128xf32, #tpu.memory_space<vmem>>, %arg5: memref<1x128xf32, #tpu.memory_space<vmem>>, %arg6: memref<2x128xf32, #tpu.memory_space<vmem>>) attributes {dimension_semantics = [], scalar_prefetch = 0 : i64, scratch_operands = 0 : i64, tpu.core_type = #tpu.core_type<tc>} {
    %c0 = arith.constant 0 : index
    %c0_0 = arith.constant 0 : index
    %c0_1 = arith.constant 0 : index
    %0 = vector.load %arg0[%c0, %c0_0, %c0_1] : memref<2x18x32xf32, #tpu.memory_space<vmem>>, vector<2x18x32xf32>
    %1 = vector.extract_strided_slice %0 {offsets = [0, 0, 0], sizes = [2, 14, 32], strides = [1, 1, 1]} : vector<2x18x32xf32> to vector<2x14x32xf32>
    %2 = vector.extract_strided_slice %0 {offsets = [0, 1, 0], sizes = [2, 14, 32], strides = [1, 1, 1]} : vector<2x18x32xf32> to vector<2x14x32xf32>
    %3 = vector.extract_strided_slice %0 {offsets = [0, 2, 0], sizes = [2, 14, 32], strides = [1, 1, 1]} : vector<2x18x32xf32> to vector<2x14x32xf32>
    %4 = vector.extract_strided_slice %0 {offsets = [0, 3, 0], sizes = [2, 14, 32], strides = [1, 1, 1]} : vector<2x18x32xf32> to vector<2x14x32xf32>
    %5 = vector.extract_strided_slice %0 {offsets = [0, 4, 0], sizes = [2, 14, 32], strides = [1, 1, 1]} : vector<2x18x32xf32> to vector<2x14x32xf32>
    %6 = tpu.concatenate %1, %2, %3, %4, %5 in 2 : vector<2x14x32xf32>, vector<2x14x32xf32>, vector<2x14x32xf32>, vector<2x14x32xf32>, vector<2x14x32xf32> -> vector<2x14x160xf32>
    %7 = vector.shape_cast %6 : vector<2x14x160xf32> to vector<28x160xf32>
    %c0_2 = arith.constant 0 : index
    %c0_3 = arith.constant 0 : index
    %8 = vector.load %arg1[%c0_2, %c0_3] : memref<160x128xf32, #tpu.memory_space<vmem>>, vector<160x128xf32>
    %cst = arith.constant dense<0.000000e+00> : vector<28x128xf32>
    %9 = tpu.matmul %7, %8, %cst {dimension_numbers = #tpu.dot_dimension_numbers<[1], [0], [0], [1], [0, 0, 1, 1], [], []>} : vector<28x160xf32>, vector<160x128xf32>, vector<28x128xf32> -> vector<28x128xf32>
    %c0_4 = arith.constant 0 : index
    %c0_5 = arith.constant 0 : index
    %10 = vector.load %arg2[%c0_4, %c0_5] : memref<1x128xf32, #tpu.memory_space<vmem>>, vector<1x128xf32>
    %11 = vector.broadcast %10 : vector<1x128xf32> to vector<28x128xf32>
    %12 = arith.addf %9, %11 : vector<28x128xf32>
    %cst_6 = arith.constant 0.000000e+00 : f32
    %13 = vector.broadcast %cst_6 : f32 to vector<28x128xf32>
    %14 = arith.maximumf %12, %13 : vector<28x128xf32>
    %15 = vector.shape_cast %14 : vector<28x128xf32> to vector<2x14x128xf32>
    %c0_7 = arith.constant 0 : index
    %c0_8 = arith.constant 0 : index
    %16 = vector.load %arg3[%c0_7, %c0_8] : memref<14x128xf32, #tpu.memory_space<vmem>>, vector<14x128xf32>
    %17 = vector.shape_cast %16 : vector<14x128xf32> to vector<1x14x128xf32>
    %18 = vector.broadcast %17 : vector<1x14x128xf32> to vector<2x14x128xf32>
    %19 = arith.mulf %15, %18 : vector<2x14x128xf32>
    %cst_9 = arith.constant dense<0xFF800000> : vector<2x128xf32>
    %20 = vector.multi_reduction <maximumf>, %19, %cst_9 [1] : vector<2x14x128xf32> to vector<2x128xf32>
    %c0_10 = arith.constant 0 : index
    %c0_11 = arith.constant 0 : index
    %21 = vector.load %arg4[%c0_10, %c0_11] : memref<128x128xf32, #tpu.memory_space<vmem>>, vector<128x128xf32>
    %cst_12 = arith.constant dense<0.000000e+00> : vector<2x128xf32>
    %22 = tpu.matmul %20, %21, %cst_12 {dimension_numbers = #tpu.dot_dimension_numbers<[1], [0], [0], [1], [0, 0, 1, 1], [], []>} : vector<2x128xf32>, vector<128x128xf32>, vector<2x128xf32> -> vector<2x128xf32>
    %c0_13 = arith.constant 0 : index
    %c0_14 = arith.constant 0 : index
    %23 = vector.load %arg5[%c0_13, %c0_14] : memref<1x128xf32, #tpu.memory_space<vmem>>, vector<1x128xf32>
    %24 = vector.broadcast %23 : vector<1x128xf32> to vector<2x128xf32>
    %25 = arith.addf %22, %24 : vector<2x128xf32>
    %c0_15 = arith.constant 0 : index
    %c0_16 = arith.constant 0 : index
    %26 = vector.load %arg6[%c0_15, %c0_16] : memref<2x128xf32, #tpu.memory_space<vmem>>, vector<2x128xf32>
    tpu.vector_store %arg6[%c0_15, %c0_16], %25 {strides = array<i32>} : memref<2x128xf32, #tpu.memory_space<vmem>>, vector<2x128xf32>,
    return
  }
}

</mosaic_0001>

<llo_original>
// kernel: tpu_custom_call.1
$region0: #{tpu_custom_call.1}
  #allocation0 [shape = 'u32[]', space=smem, size = 0x4, offset = 0x4, fixed_abs, tag = 'smem constant byte address 0x4 - core index']
  #allocation1 [shape = 'u32[144,128]{1,0:T(1,128)}', space=vmem, size = 0x12000, scoped, tag = 'internal scratch']
  %s0 = inlined_call_operand.vmem [shape: f32[2,18,32], index: 0, kind: input, shape index: {}]
  %s1 = inlined_call_operand.hbm [shape: f32[160,128], index: 1, kind: input, shape index: {}]
  %s2 = inlined_call_operand.vmem [shape: f32[1,128], index: 2, kind: input, shape index: {}]
  %s3 = inlined_call_operand.vmem [shape: f32[14,128], index: 3, kind: input, shape index: {}]
  %s4 = inlined_call_operand.hbm [shape: f32[128,128], index: 4, kind: input, shape index: {}]
  %s5 = inlined_call_operand.vmem [shape: f32[1,128], index: 5, kind: input, shape index: {}]
  %s6 = inlined_call_operand.hbm [shape: f32[2,128], index: 6, kind: output, shape index: {}]
  %s7 = sld [smem:[#allocation0]]
  $region42: #{tpu_custom_call.1} parent=0
    _
  %s9 = ssub.s32 1, %s7
  %s10 = scalar_select 0, %s9, %s7
  $region1: #{tpu_custom_call.1} parent=0
    #allocation2 [shape = 'u8[81920]{0}', space=vmem, size = 0x14000, scoped, tag = 'input window, operand 1, single buffered']
    #allocation3 [shape = 's32[1]{0}', space=sflag, size = 0x4, scoped, tag = 'scoped memory for tpu_custom_call.1']
    #allocation4 [shape = 's32[1]{0}', space=sflag, size = 0x4, scoped, tag = 'scoped memory for tpu_custom_call.1']
    #allocation5 [shape = 'u8[65536]{0}', space=vmem, size = 0x10000, scoped, tag = 'input window, operand 4, single buffered']
    #allocation6 [shape = 's32[1]{0}', space=sflag, size = 0x4, scoped, tag = 'scoped memory for tpu_custom_call.1']
    #allocation7 [shape = 'u8[1024]{0}', space=vmem, size = 0x400, scoped, tag = 'output window, operand 0, single buffered']
    %11 = vsyncpa [#allocation3], 0
    %12 = vsyncpa [#allocation6], 0
    %13 = vsyncpa [#allocation4], 0
    // Predicated region
    $region2: #{tpu_custom_call.1} parent=1 // pred_check
      _
    $region3: #{tpu_custom_call.1} parent=1 // pred_check_branch
      %15 = sbr.rel (0) target = $region5
    $region4: #{tpu_custom_call.1} parent=1 // pred_region
      _
    $region5: #{tpu_custom_call.1} parent=1 // pred_fallthru
      _
    // Predicated region
    $region6: #{tpu_custom_call.1} parent=1 // pred_check
      _
    $region7: #{tpu_custom_call.1} parent=1 // pred_check_branch
      %17 = sbr.rel (0) target = $region9
    $region8: #{tpu_custom_call.1} parent=1 // pred_region
      %s19 = ssub.s32 2560, 2560
      %20 = vsyncadd [#allocation3], %s19
      %s21 = sshll.u32 [#allocation2], 4
      %s22 = int_to_ptr.vmem [resolvable:$true] %s21
      %27 = dma.hbm_to_vmem [thread:$0]  %s1, 2560, %s22, [#allocation3], 128, 128, 8
    $region9: #{tpu_custom_call.1} parent=1 // pred_fallthru
      _
    // Predicated region
    $region10: #{tpu_custom_call.1} parent=1 // pred_check
      _
    $region11: #{tpu_custom_call.1} parent=1 // pred_check_branch
      %29 = sbr.rel (0) target = $region13
    $region12: #{tpu_custom_call.1} parent=1 // pred_region
      _
    $region13: #{tpu_custom_call.1} parent=1 // pred_fallthru
      _
    // Predicated region
    $region14: #{tpu_custom_call.1} parent=1 // pred_check
      _
    $region15: #{tpu_custom_call.1} parent=1 // pred_check_branch
      %31 = sbr.rel (0) target = $region17
    $region16: #{tpu_custom_call.1} parent=1 // pred_region
      _
    $region17: #{tpu_custom_call.1} parent=1 // pred_fallthru
      _
    // Predicated region
    $region18: #{tpu_custom_call.1} parent=1 // pred_check
      _
    $region19: #{tpu_custom_call.1} parent=1 // pred_check_branch
      %33 = sbr.rel (0) target = $region21
    $region20: #{tpu_custom_call.1} parent=1 // pred_region
      %s35 = ssub.s32 2048, 2048
      %36 = vsyncadd [#allocation6], %s35
      %s37 = sshll.u32 [#allocation5], 4
      %s38 = int_to_ptr.vmem [resolvable:$true] %s37
      %43 = dma.hbm_to_vmem [thread:$0]  %s4, 2048, %s38, [#allocation6], 128, 128, 8
    $region21: #{tpu_custom_call.1} parent=1 // pred_fallthru
      _
    // Predicated region
    $region22: #{tpu_custom_call.1} parent=1 // pred_check
      _
    $region23: #{tpu_custom_call.1} parent=1 // pred_check_branch
      %45 = sbr.rel (0) target = $region25
    $region24: #{tpu_custom_call.1} parent=1 // pred_region
      _
    $region25: #{tpu_custom_call.1} parent=1 // pred_fallthru
      _
    // Predicated region
    $region26: #{tpu_custom_call.1} parent=1 // pred_check
      _
    $region27: #{tpu_custom_call.1} parent=1 // pred_check_branch
      %47 = sbr.rel (0) target = $region29
    $region28: #{tpu_custom_call.1} parent=1 // pred_region
      %48 = dma.done [#allocation3], 2560
    $region29: #{tpu_custom_call.1} parent=1 // pred_fallthru
      _
    // Predicated region
    $region30: #{tpu_custom_call.1} parent=1 // pred_check
      _
    $region31: #{tpu_custom_call.1} parent=1 // pred_check_branch
      %50 = sbr.rel (0) target = $region33
    $region32: #{tpu_custom_call.1} parent=1 // pred_region
      %51 = dma.done [#allocation6], 2048
    $region33: #{tpu_custom_call.1} parent=1 // pred_fallthru
      _
    %v52 = vld [vmem:[%s0] sm:$0xff]
    %v53 = vld [vmem:[%s0 + $0x8] sm:$0xff]
    %v54 = vld [vmem:[%s0 + $0x10] sm:$0x3]
    %v55 = vld [vmem:[%s0 + $0x18] sm:$0xff]
    %v56 = vld [vmem:[%s0 + $0x20] sm:$0xff]
    %v57 = vld [vmem:[%s0 + $0x28] sm:$0x3]
    %vm62 = vcmask 1046528
    %v63 = vrot.slane %v52, 1
    %v64 = vrot.slane %v53, 1
    %v65 = vsel %vm62, %v63, %v64
    %v66 = vrot.slane %v55, 1
    %v67 = vrot.slane %v56, 1
    %v68 = vsel %vm62, %v66, %v67
    %69 = vrot.lane.b32.xlu0 %v65, 32
    %v70 = vpop.permute.xlu0 %69
    %71 = vrot.lane.b32.xlu0 %v64, 32
    %v72 = vpop.permute.xlu0 %71
    %73 = vrot.lane.b32.xlu0 %v68, 32
    %v74 = vpop.permute.xlu0 %73
    %75 = vrot.lane.b32.xlu0 %v67, 32
    %v76 = vpop.permute.xlu0 %75
    %vm81 = vcmask 1045504
    %v82 = vrot.slane %v52, 2
    %v83 = vrot.slane %v53, 2
    %v84 = vsel %vm81, %v82, %v83
    %v85 = vrot.slane %v55, 2
    %v86 = vrot.slane %v56, 2
    %v87 = vsel %vm81, %v85, %v86
    %88 = vrot.lane.b32.xlu0 %v84, 64
    %v89 = vpop.permute.xlu0 %88
    %90 = vrot.lane.b32.xlu0 %v83, 64
    %v91 = vpop.permute.xlu0 %90
    %92 = vrot.lane.b32.xlu0 %v87, 64
    %v93 = vpop.permute.xlu0 %92
    %94 = vrot.lane.b32.xlu0 %v86, 64
    %v95 = vpop.permute.xlu0 %94
    %vm102 = vcmask 1044480
    %v103 = vrot.slane %v52, 3
    %v104 = vrot.slane %v53, 3
    %v105 = vsel %vm102, %v103, %v104
    %v106 = vrot.slane %v54, 3
    %v107 = vsel %vm102, %v104, %v106
    %v108 = vrot.slane %v55, 3
    %v109 = vrot.slane %v56, 3
    %v110 = vsel %vm102, %v108, %v109
    %v111 = vrot.slane %v57, 3
    %v112 = vsel %vm102, %v109, %v111
    %113 = vrot.lane.b32.xlu0 %v105, 96
    %v114 = vpop.permute.xlu0 %113
    %115 = vrot.lane.b32.xlu0 %v107, 96
    %v116 = vpop.permute.xlu0 %115
    %117 = vrot.lane.b32.xlu0 %v110, 96
    %v118 = vpop.permute.xlu0 %117
    %119 = vrot.lane.b32.xlu0 %v112, 96
    %v120 = vpop.permute.xlu0 %119
    %vm125 = vcmask 1043456
    %v126 = vrot.slane %v52, 4
    %v127 = vrot.slane %v53, 4
    %v128 = vsel %vm125, %v126, %v127
    %v129 = vrot.slane %v54, 4
    %v130 = vsel %vm125, %v127, %v129
    %v131 = vrot.slane %v55, 4
    %v132 = vrot.slane %v56, 4
    %v133 = vsel %vm125, %v131, %v132
    %v134 = vrot.slane %v57, 4
    %v135 = vsel %vm125, %v132, %v134
    %vm136 = vcmask 261120
    %v137 = vsel %vm136, %v52, %v70
    %v138 = vsel %vm136, %v53, %v72
    %v139 = vsel %vm136, %v55, %v74
    %v140 = vsel %vm136, %v56, %v76
    %vm141 = vcmask 523264
    %v142 = vsel %vm141, %v137, %v89
    %v143 = vsel %vm141, %v138, %v91
    %v144 = vsel %vm141, %v139, %v93
    %v145 = vsel %vm141, %v140, %v95
    %vm146 = vcmask 785408
    %v147 = vsel %vm146, %v142, %v114
    %v148 = vsel %vm146, %v143, %v116
    %v149 = vsel %vm146, %v144, %v118
    %v150 = vsel %vm146, %v145, %v120
    %v155 = vcombine.low %v147, %v128
    %v156 = vcombine.high %v147, %v128
    %v158 = vunpack.c.l.s4 1983009808
    %v159 = vunpack.c.0.s8 %v158
    %v160 = vlaneseq
    %v161 = vshrl.u32 %v160, 7
    %v162 = vsub.s32 %v159, %v161
    %v163 = vrot.slane %v155, %v162
    %v165 = vunpack.c.l.s4 1983009808
    %v166 = vunpack.c.0.s8 %v165
    %v167 = vlaneseq
    %v168 = vshrl.u32 %v167, 7
    %v169 = vsub.s32 %v166, %v168
    %v170 = vrot.slane %v156, %v169
    %v171 = vcombine.high %v163, %v163
    %v172 = vcombine.high %v170, %v170
    %v173 = vcombine.low %v148, %v130
    %v174 = vcombine.high %v148, %v130
    %v176 = vunpack.c.l.s4 1983009808
    %v177 = vunpack.c.0.s8 %v176
    %v178 = vlaneseq
    %v179 = vshrl.u32 %v178, 7
    %v180 = vsub.s32 %v177, %v179
    %v181 = vrot.slane %v173, %v180
    %v183 = vunpack.c.l.s4 1983009808
    %v184 = vunpack.c.0.s8 %v183
    %v185 = vlaneseq
    %v186 = vshrl.u32 %v185, 7
    %v187 = vsub.s32 %v184, %v186
    %v188 = vrot.slane %v174, %v187
    %v189 = vcombine.high %v181, %v181
    %v190 = vcombine.low %v149, %v133
    %v191 = vcombine.high %v149, %v133
    %v193 = vunpack.c.l.s4 1983009808
    %v194 = vunpack.c.0.s8 %v193
    %v195 = vlaneseq
    %v196 = vshrl.u32 %v195, 7
    %v197 = vsub.s32 %v194, %v196
    %v198 = vrot.slane %v190, %v197
    %v200 = vunpack.c.l.s4 1983009808
    %v201 = vunpack.c.0.s8 %v200
    %v202 = vlaneseq
    %v203 = vshrl.u32 %v202, 7
    %v204 = vsub.s32 %v201, %v203
    %v205 = vrot.slane %v191, %v204
    %v206 = vcombine.high %v198, %v198
    %v207 = vcombine.high %v205, %v205
    %v208 = vcombine.low %v150, %v135
    %v209 = vcombine.high %v150, %v135
    %v211 = vunpack.c.l.s4 1983009808
    %v212 = vunpack.c.0.s8 %v211
    %v213 = vlaneseq
    %v214 = vshrl.u32 %v213, 7
    %v215 = vsub.s32 %v212, %v214
    %v216 = vrot.slane %v208, %v215
    %v218 = vunpack.c.l.s4 1983009808
    %v219 = vunpack.c.0.s8 %v218
    %v220 = vlaneseq
    %v221 = vshrl.u32 %v220, 7
    %v222 = vsub.s32 %v219, %v221
    %v223 = vrot.slane %v209, %v222
    %v224 = vcombine.high %v216, %v216
    %v225 = vld [vmem:[#allocation2] sm:$0xff]
    %v226 = vld [vmem:[#allocation2 + $0x8] sm:$0xff]
    %v227 = vld [vmem:[#allocation2 + $0x10] sm:$0xff]
    %v228 = vld [vmem:[#allocation2 + $0x18] sm:$0xff]
    %v229 = vld [vmem:[#allocation2 + $0x20] sm:$0xff]
    %v230 = vld [vmem:[#allocation2 + $0x28] sm:$0xff]
    %v231 = vld [vmem:[#allocation2 + $0x30] sm:$0xff]
    %v232 = vld [vmem:[#allocation2 + $0x38] sm:$0xff]
    %v233 = vld [vmem:[#allocation2 + $0x40] sm:$0xff]
    %v234 = vld [vmem:[#allocation2 + $0x48] sm:$0xff]
    %v235 = vld [vmem:[#allocation2 + $0x50] sm:$0xff]
    %v236 = vld [vmem:[#allocation2 + $0x58] sm:$0xff]
    %v237 = vld [vmem:[#allocation2 + $0x60] sm:$0xff]
    %v238 = vld [vmem:[#allocation2 + $0x68] sm:$0xff]
    %v239 = vld [vmem:[#allocation2 + $0x70] sm:$0xff]
    %v240 = vld [vmem:[#allocation2 + $0x78] sm:$0xff]
    %v241 = vld [vmem:[#allocation2 + $0x80] sm:$0xff]
    %v242 = vld [vmem:[#allocation2 + $0x88] sm:$0xff]
    %v243 = vld [vmem:[#allocation2 + $0x90] sm:$0xff]
    %v244 = vld [vmem:[#allocation2 + $0x98] sm:$0xff]
    %v245 = vld [vmem:[%s2] sm:$0x1]
    %v247 = vlaneseq
    %v248 = vshrl.u32 %v247, 7
    %v249 = vsub.s32 0, %v248
    %v250 = vrot.slane %v245, %v249
    %v252 = vcombine.low %v163, %v171
    %v253 = vcombine.low %v170, %v172
    %v255 = vunpack.c.l.s4 1983009808
    %v256 = vunpack.c.0.s8 %v255
    %v257 = vlaneseq
    %v258 = vshrl.u32 %v257, 7
    %v259 = vsub.s32 %v256, %v258
    %v260 = vrot.slane %v252, %v259
    %v262 = vunpack.c.l.s4 1983009808
    %v263 = vunpack.c.0.s8 %v262
    %v264 = vlaneseq
    %v265 = vshrl.u32 %v264, 7
    %v266 = vsub.s32 %v263, %v265
    %v267 = vrot.slane %v253, %v266
    %v268 = vcombine.low %v260, %v267
    %v269 = vcombine.high %v260, %v267
    %v270 = vcombine.low %v181, %v189
    %v271 = vcombine.low %v188, %v198
    %v273 = vunpack.c.l.s4 1983009808
    %v274 = vunpack.c.0.s8 %v273
    %v275 = vlaneseq
    %v276 = vshrl.u32 %v275, 7
    %v277 = vsub.s32 %v274, %v276
    %v278 = vrot.slane %v270, %v277
    %v280 = vunpack.c.l.s4 1983009808
    %v281 = vunpack.c.0.s8 %v280
    %v282 = vlaneseq
    %v283 = vshrl.u32 %v282, 7
    %v284 = vsub.s32 %v281, %v283
    %v285 = vrot.slane %v271, %v284
    %v286 = vcombine.low %v278, %v285
    %v287 = vcombine.high %v278, %v285
    %v288 = vcombine.low %v206, %v205
    %v289 = vcombine.low %v207, %v216
    %v291 = vunpack.c.l.s4 1983009808
    %v292 = vunpack.c.0.s8 %v291
    %v293 = vlaneseq
    %v294 = vshrl.u32 %v293, 7
    %v295 = vsub.s32 %v292, %v294
    %v296 = vrot.slane %v288, %v295
    %v298 = vunpack.c.l.s4 1983009808
    %v299 = vunpack.c.0.s8 %v298
    %v300 = vlaneseq
    %v301 = vshrl.u32 %v300, 7
    %v302 = vsub.s32 %v299, %v301
    %v303 = vrot.slane %v289, %v302
    %v304 = vcombine.low %v296, %v303
    %v305 = vcombine.high %v296, %v303
    %v306 = vcombine.low %v224, %v223
    %v308 = vunpack.c.l.s4 1983009808
    %v309 = vunpack.c.0.s8 %v308
    %v310 = vlaneseq
    %v311 = vshrl.u32 %v310, 7
    %v312 = vsub.s32 %v309, %v311
    %v313 = vrot.slane %v306, %v312
    %v314 = vcombine.high %v313, %v313
    %v319 = vsel %vm136, %v269, 0
    %v321 = vsel %vm136, %v287, 0
    %v323 = vsel %vm136, %v305, 0
    %v325 = vsel %vm136, %v314, 0
    %327 = vmatprep.subr.mxu0 0.0
    %328 = vmatpush1.msra.mxu0 %v225
    %329 = vmatprep.subr.mxu0 0.0
    %330 = vmatpush1.msra.mxu0 %v226
    %331 = vmatprep.subr.mxu0 0.0
    %332 = vmatpush1.msra.mxu0 %v227
    %333 = vmatprep.subr.mxu0 0.0
    %334 = vmatpush1.msra.mxu0 %v228
    %335 = vmatprep.subr.mxu0 0.0
    %336 = vmatpush1.msra.mxu0 %v229
    %337 = vmatprep.subr.mxu0 0.0
    %338 = vmatpush1.msra.mxu0 %v230
    %339 = vmatprep.subr.mxu0 0.0
    %340 = vmatpush1.msra.mxu0 %v231
    %341 = vmatprep.subr.mxu0 0.0
    %342 = vmatpush1.msra.mxu0 %v232
    %343 = vmatprep.subr.mxu0 0.0
    %344 = vmatpush1.msra.mxu0 %v233
    %345 = vmatprep.subr.mxu0 0.0
    %346 = vmatpush1.msra.mxu0 %v234
    %347 = vmatprep.subr.mxu0 0.0
    %348 = vmatpush1.msra.mxu0 %v235
    %349 = vmatprep.subr.mxu0 0.0
    %350 = vmatpush1.msra.mxu0 %v236
    %351 = vmatprep.subr.mxu0 0.0
    %352 = vmatpush1.msra.mxu0 %v237
    %353 = vmatprep.subr.mxu0 0.0
    %354 = vmatpush1.msra.mxu0 %v238
    %355 = vmatprep.subr.mxu0 0.0
    %356 = vmatpush1.msra.mxu0 %v239
    %357 = vmatprep.subr.mxu0 0.0
    %358 = vmatpush1.msra.mxu0 %v240
    %359 = vmatprep.subr.mxu0 0.0
    %360 = vmatpush1.msra.mxu0 %v241
    %361 = vmatprep.subr.mxu0 0.0
    %362 = vmatpush1.msra.mxu0 %v242
    %363 = vmatprep.subr.mxu0 0.0
    %364 = vmatpush1.msra.mxu0 %v243
    %365 = vmatprep.subr.mxu0 0.0
    %366 = vmatpush1.msra.mxu0 %v244
    %367 = vmatprep.subr.mxu0 0.0
    %368 = vmatpush1.msra.mxu0 0.0
    %369 = vmatprep.subr.mxu0 0.0
    %370 = vmatpush1.msra.mxu0 0.0
    %371 = vmatprep.subr.mxu0 0.0
    %372 = vmatpush1.msra.mxu0 0.0
    %373 = vmatprep.subr.mxu0 0.0
    %374 = vmatpush1.msra.mxu0 0.0
    %375 = vmatprep.subr.mxu0 0.0
    %376 = vmatpush1.msra.mxu0 0.0
    %377 = vmatprep.subr.mxu0 0.0
    %378 = vmatpush1.msra.mxu0 0.0
    %379 = vmatprep.subr.mxu0 0.0
    %380 = vmatpush1.msra.mxu0 0.0
    %381 = vmatprep.subr.mxu0 0.0
    %382 = vmatpush1.msra.mxu0 0.0
    %383 = vmatprep.subr.mxu0 0.0
    %384 = vmatpush1.msra.mxu0 0.0
    %385 = vmatprep.subr.mxu0 0.0
    %386 = vmatpush1.msra.mxu0 0.0
    %387 = vmatprep.subr.mxu0 0.0
    %388 = vmatpush1.msra.mxu0 0.0
    %389 = vmatprep.subr.mxu0 0.0
    %390 = vmatpush1.msra.mxu0 0.0
    %391 = vmatprep.mubr.f32.mxu0 %v319
    %392 = vmatmul.mubr.f32.gmra.mrb[0].mxu0 %v268
    %v393 = vpop.f32.mrb[0].mxu0
    %v394 = vadd.f32 %v250, %v393
    %v395 = vpop.f32.mrb[0].mxu0
    %396 = vmatprep.mubr.f32.mxu0 %v321
    %397 = vmatmul.mubr.f32.gmra.mrb[0].mxu0 %v286
    %v398 = vpop.f32.mrb[0].mxu0
    %v399 = vadd.f32 %v250, %v398
    %v400 = vpop.f32.mrb[0].mxu0
    %401 = vmatprep.mubr.f32.mxu0 %v323
    %402 = vmatmul.mubr.f32.gmra.mrb[0].mxu0 %v304
    %v403 = vpop.f32.mrb[0].mxu0
    %v404 = vadd.f32 %v250, %v403
    %v405 = vpop.f32.mrb[0].mxu0
    %406 = vmatprep.mubr.f32.mxu0 %v325
    %407 = vmatmul.mubr.f32.gmra.mrb[0].mxu0 %v313
    %v408 = vpop.f32.mrb[0].mxu0
    %v409 = vadd.f32 %v250, %v408
    %v410 = vpop.f32.mrb[0].mxu0
    %411 = vdwg.mxu0
    %v412 = vmax.f32 %v394, 0.0
    %v413 = vmax.f32 %v399, 0.0
    %v414 = vmax.f32 %v404, 0.0
    %v415 = vmax.f32 %v409, 0.0
    %v420 = vcombine.high %v412, %v412
    %v422 = vunpack.c.l.s4 1983009808
    %v423 = vunpack.c.0.s8 %v422
    %v424 = vlaneseq
    %v425 = vshrl.u32 %v424, 7
    %v426 = vsub.s32 %v423, %v425
    %v427 = vrot.slane %v412, %v426
    %v429 = vunpack.c.l.s4 1983009808
    %v430 = vunpack.c.0.s8 %v429
    %v431 = vlaneseq
    %v432 = vshrl.u32 %v431, 7
    %v433 = vsub.s32 %v430, %v432
    %v434 = vrot.slane %v420, %v433
    %v435 = vcombine.high %v427, %v427
    %v436 = vcombine.high %v434, %v434
    %v437 = vcombine.high %v413, %v413
    %v439 = vunpack.c.l.s4 1983009808
    %v440 = vunpack.c.0.s8 %v439
    %v441 = vlaneseq
    %v442 = vshrl.u32 %v441, 7
    %v443 = vsub.s32 %v440, %v442
    %v444 = vrot.slane %v413, %v443
    %v446 = vunpack.c.l.s4 1983009808
    %v447 = vunpack.c.0.s8 %v446
    %v448 = vlaneseq
    %v449 = vshrl.u32 %v448, 7
    %v450 = vsub.s32 %v447, %v449
    %v451 = vrot.slane %v437, %v450
    %v452 = vcombine.high %v444, %v444
    %v453 = vcombine.high %v451, %v451
    %v454 = vcombine.high %v414, %v414
    %v456 = vunpack.c.l.s4 1983009808
    %v457 = vunpack.c.0.s8 %v456
    %v458 = vlaneseq
    %v459 = vshrl.u32 %v458, 7
    %v460 = vsub.s32 %v457, %v459
    %v461 = vrot.slane %v414, %v460
    %v463 = vunpack.c.l.s4 1983009808
    %v464 = vunpack.c.0.s8 %v463
    %v465 = vlaneseq
    %v466 = vshrl.u32 %v465, 7
    %v467 = vsub.s32 %v464, %v466
    %v468 = vrot.slane %v454, %v467
    %v469 = vcombine.high %v461, %v461
    %v470 = vcombine.high %v468, %v468
    %v472 = vunpack.c.l.s4 1983009808
    %v473 = vunpack.c.0.s8 %v472
    %v474 = vlaneseq
    %v475 = vshrl.u32 %v474, 7
    %v476 = vsub.s32 %v473, %v475
    %v477 = vrot.slane %v415, %v476
    %v478 = vcombine.high %v477, %v477
    %v493 = vld [vmem:[%s3] sm:$0xff]
    %v494 = vld [vmem:[%s3 + $0x8] sm:$0x3f]
    %v497 = vcombine.high %v493, %v493
    %v499 = vunpack.c.l.s4 1983009808
    %v500 = vunpack.c.0.s8 %v499
    %v501 = vlaneseq
    %v502 = vshrl.u32 %v501, 7
    %v503 = vsub.s32 %v500, %v502
    %v504 = vrot.slane %v493, %v503
    %v506 = vunpack.c.l.s4 1983009808
    %v507 = vunpack.c.0.s8 %v506
    %v508 = vlaneseq
    %v509 = vshrl.u32 %v508, 7
    %v510 = vsub.s32 %v507, %v509
    %v511 = vrot.slane %v497, %v510
    %v512 = vcombine.high %v504, %v504
    %v513 = vcombine.high %v511, %v511
    %v514 = vcombine.high %v494, %v494
    %v516 = vunpack.c.l.s4 1983009808
    %v517 = vunpack.c.0.s8 %v516
    %v518 = vlaneseq
    %v519 = vshrl.u32 %v518, 7
    %v520 = vsub.s32 %v517, %v519
    %v521 = vrot.slane %v494, %v520
    %v523 = vunpack.c.l.s4 1983009808
    %v524 = vunpack.c.0.s8 %v523
    %v525 = vlaneseq
    %v526 = vshrl.u32 %v525, 7
    %v527 = vsub.s32 %v524, %v526
    %v528 = vrot.slane %v514, %v527
    %v529 = vcombine.high %v521, %v521
    %v537 = vmul.f32 %v427, %v504
    %v538 = vmul.f32 %v435, %v512
    %v539 = vmul.f32 %v434, %v511
    %v540 = vmul.f32 %v436, %v513
    %v541 = vmul.f32 %v444, %v521
    %v542 = vmul.f32 %v452, %v529
    %v543 = vmul.f32 %v451, %v528
    %v544 = vmul.f32 %v453, %v504
    %v545 = vmul.f32 %v461, %v512
    %v546 = vmul.f32 %v469, %v511
    %v547 = vmul.f32 %v468, %v513
    %v548 = vmul.f32 %v470, %v521
    %v549 = vmul.f32 %v477, %v529
    %v550 = vmul.f32 %v478, %v528
    %v565 = vcombine.low %v537, %v538
    %v566 = vcombine.low %v539, %v540
    %v568 = vunpack.c.l.s4 1983009808
    %v569 = vunpack.c.0.s8 %v568
    %v570 = vlaneseq
    %v571 = vshrl.u32 %v570, 7
    %v572 = vsub.s32 %v569, %v571
    %v573 = vrot.slane %v565, %v572
    %v575 = vunpack.c.l.s4 1983009808
    %v576 = vunpack.c.0.s8 %v575
    %v577 = vlaneseq
    %v578 = vshrl.u32 %v577, 7
    %v579 = vsub.s32 %v576, %v578
    %v580 = vrot.slane %v566, %v579
    %v581 = vcombine.low %v573, %v580
    %v582 = vcombine.low %v541, %v542
    %v584 = vunpack.c.l.s4 1983009808
    %v585 = vunpack.c.0.s8 %v584
    %v586 = vlaneseq
    %v587 = vshrl.u32 %v586, 7
    %v588 = vsub.s32 %v585, %v587
    %v589 = vrot.slane %v582, %v588
    %v591 = vunpack.c.l.s4 1983009808
    %v592 = vunpack.c.0.s8 %v591
    %v593 = vlaneseq
    %v594 = vshrl.u32 %v593, 7
    %v595 = vsub.s32 %v592, %v594
    %v596 = vrot.slane %v543, %v595
    %v597 = vcombine.low %v589, %v596
    %v598 = vcombine.low %v544, %v545
    %v599 = vcombine.low %v546, %v547
    %v601 = vunpack.c.l.s4 1983009808
    %v602 = vunpack.c.0.s8 %v601
    %v603 = vlaneseq
    %v604 = vshrl.u32 %v603, 7
    %v605 = vsub.s32 %v602, %v604
    %v606 = vrot.slane %v598, %v605
    %v608 = vunpack.c.l.s4 1983009808
    %v609 = vunpack.c.0.s8 %v608
    %v610 = vlaneseq
    %v611 = vshrl.u32 %v610, 7
    %v612 = vsub.s32 %v609, %v611
    %v613 = vrot.slane %v599, %v612
    %v614 = vcombine.low %v606, %v613
    %v615 = vcombine.low %v548, %v549
    %v617 = vunpack.c.l.s4 1983009808
    %v618 = vunpack.c.0.s8 %v617
    %v619 = vlaneseq
    %v620 = vshrl.u32 %v619, 7
    %v621 = vsub.s32 %v618, %v620
    %v622 = vrot.slane %v615, %v621
    %v624 = vunpack.c.l.s4 1983009808
    %v625 = vunpack.c.0.s8 %v624
    %v626 = vlaneseq
    %v627 = vshrl.u32 %v626, 7
    %v628 = vsub.s32 %v625, %v627
    %v629 = vrot.slane %v550, %v628
    %v630 = vcombine.low %v622, %v629
    %v635 = vsel %vm81, %v597, -inf
    %v636 = vmax.f32 %v581, %v635
    %v637 = vrot.slane %v636, 4
    %v638 = vmax.f32 %v636, %v637
    %v639 = vrot.slane %v638, 2
    %v640 = vmax.f32 %v638, %v639
    %v641 = vrot.slane %v640, 1
    %v642 = vmax.f32 %v640, %v641
    %v643 = vsel %vm81, %v630, -inf
    %v644 = vmax.f32 %v614, %v643
    %v645 = vrot.slane %v644, 4
    %v646 = vmax.f32 %v644, %v645
    %v647 = vrot.slane %v646, 2
    %v648 = vmax.f32 %v646, %v647
    %v649 = vrot.slane %v648, 1
    %v650 = vmax.f32 %v648, %v649
    %v651 = vld [vmem:[#allocation5] sm:$0xff]
    %v652 = vld [vmem:[#allocation5 + $0x8] sm:$0xff]
    %v653 = vld [vmem:[#allocation5 + $0x10] sm:$0xff]
    %v654 = vld [vmem:[#allocation5 + $0x18] sm:$0xff]
    %v655 = vld [vmem:[#allocation5 + $0x20] sm:$0xff]
    %v656 = vld [vmem:[#allocation5 + $0x28] sm:$0xff]
    %v657 = vld [vmem:[#allocation5 + $0x30] sm:$0xff]
    %v658 = vld [vmem:[#allocation5 + $0x38] sm:$0xff]
    %v659 = vld [vmem:[#allocation5 + $0x40] sm:$0xff]
    %v660 = vld [vmem:[#allocation5 + $0x48] sm:$0xff]
    %v661 = vld [vmem:[#allocation5 + $0x50] sm:$0xff]
    %v662 = vld [vmem:[#allocation5 + $0x58] sm:$0xff]
    %v663 = vld [vmem:[#allocation5 + $0x60] sm:$0xff]
    %v664 = vld [vmem:[#allocation5 + $0x68] sm:$0xff]
    %v665 = vld [vmem:[#allocation5 + $0x70] sm:$0xff]
    %v666 = vld [vmem:[#allocation5 + $0x78] sm:$0xff]
    %v667 = vld [vmem:[%s5] sm:$0x1]
    %v669 = vlaneseq
    %v670 = vshrl.u32 %v669, 7
    %v671 = vsub.s32 0, %v670
    %v672 = vrot.slane %v667, %v671
    %vm676 = vcmask 1041409
    %v677 = vsel %vm676, %v650, %v642
    %679 = vmatprep.subr.mxu0 0.0
    %680 = vmatpush1.msra.mxu0 %v651
    %681 = vmatprep.subr.mxu0 0.0
    %682 = vmatpush1.msra.mxu0 %v652
    %683 = vmatprep.subr.mxu0 0.0
    %684 = vmatpush1.msra.mxu0 %v653
    %685 = vmatprep.subr.mxu0 0.0
    %686 = vmatpush1.msra.mxu0 %v654
    %687 = vmatprep.subr.mxu0 0.0
    %688 = vmatpush1.msra.mxu0 %v655
    %689 = vmatprep.subr.mxu0 0.0
    %690 = vmatpush1.msra.mxu0 %v656
    %691 = vmatprep.subr.mxu0 0.0
    %692 = vmatpush1.msra.mxu0 %v657
    %693 = vmatprep.subr.mxu0 0.0
    %694 = vmatpush1.msra.mxu0 %v658
    %695 = vmatprep.subr.mxu0 0.0
    %696 = vmatpush1.msra.mxu0 %v659
    %697 = vmatprep.subr.mxu0 0.0
    %698 = vmatpush1.msra.mxu0 %v660
    %699 = vmatprep.subr.mxu0 0.0
    %700 = vmatpush1.msra.mxu0 %v661
    %701 = vmatprep.subr.mxu0 0.0
    %702 = vmatpush1.msra.mxu0 %v662
    %703 = vmatprep.subr.mxu0 0.0
    %704 = vmatpush1.msra.mxu0 %v663
    %705 = vmatprep.subr.mxu0 0.0
    %706 = vmatpush1.msra.mxu0 %v664
    %707 = vmatprep.subr.mxu0 0.0
    %708 = vmatpush1.msra.mxu0 %v665
    %709 = vmatprep.subr.mxu0 0.0
    %710 = vmatpush1.msra.mxu0 %v666
    %711 = vmatprep.subr.mxu0 0.0
    %712 = vmatpush1.msra.mxu0 0.0
    %713 = vmatprep.subr.mxu0 0.0
    %714 = vmatpush1.msra.mxu0 0.0
    %715 = vmatprep.subr.mxu0 0.0
    %716 = vmatpush1.msra.mxu0 0.0
    %717 = vmatprep.subr.mxu0 0.0
    %718 = vmatpush1.msra.mxu0 0.0
    %719 = vmatprep.subr.mxu0 0.0
    %720 = vmatpush1.msra.mxu0 0.0
    %721 = vmatprep.subr.mxu0 0.0
    %722 = vmatpush1.msra.mxu0 0.0
    %723 = vmatprep.subr.mxu0 0.0
    %724 = vmatpush1.msra.mxu0 0.0
    %725 = vmatprep.subr.mxu0 0.0
    %726 = vmatpush1.msra.mxu0 0.0
    %727 = vmatprep.subr.mxu0 0.0
    %728 = vmatpush1.msra.mxu0 0.0
    %729 = vmatprep.subr.mxu0 0.0
    %730 = vmatpush1.msra.mxu0 0.0
    %731 = vmatprep.subr.mxu0 0.0
    %732 = vmatpush1.msra.mxu0 0.0
    %733 = vmatprep.subr.mxu0 0.0
    %734 = vmatpush1.msra.mxu0 0.0
    %735 = vmatprep.subr.mxu0 0.0
    %736 = vmatpush1.msra.mxu0 0.0
    %737 = vmatprep.subr.mxu0 0.0
    %738 = vmatpush1.msra.mxu0 0.0
    %739 = vmatprep.subr.mxu0 0.0
    %740 = vmatpush1.msra.mxu0 0.0
    %741 = vmatprep.subr.mxu0 0.0
    %742 = vmatpush1.msra.mxu0 0.0
    %743 = vmatprep.mubr.f32.mxu0 0.0
    %744 = vmatmul.mubr.f32.gmra.mrb[0].mxu0 %v677
    %v745 = vpop.f32.mrb[0].mxu0
    %v746 = vadd.f32 %v672, %v745
    %v747 = vpop.f32.mrb[0].mxu0
    %748 = vdwg.mxu0
    %749 = vst [vmem:[#allocation7] sm:$0x3] %v746
    // Predicated region
    $region34: #{tpu_custom_call.1} parent=1 // pred_check
      _
    $region35: #{tpu_custom_call.1} parent=1 // pred_check_branch
      %751 = sbr.rel (0) target = $region37
    $region36: #{tpu_custom_call.1} parent=1 // pred_region
      %s753 = ssub.s32 32, 32
      %754 = vsyncadd [#allocation4], %s753
      %s756 = sshll.u32 [#allocation7], 4
      %s757 = int_to_ptr.vmem [resolvable:$true] %s756
      %759 = dma.vmem_to_hbm [thread:$0]  %s757, 32, %s6, [#allocation4]
    $region37: #{tpu_custom_call.1} parent=1 // pred_fallthru
      _
    // Predicated region
    $region38: #{tpu_custom_call.1} parent=1 // pred_check
      _
    $region39: #{tpu_custom_call.1} parent=1 // pred_check_branch
      %761 = sbr.rel (0) target = $region41
    $region40: #{tpu_custom_call.1} parent=1 // pred_region
      %762 = dma.done [#allocation4], 32
    $region41: #{tpu_custom_call.1} parent=1 // pred_fallthru
      _
    %763 = vsyncpa [#allocation3], 1
    %764 = vsyncpa [#allocation6], 1
    %765 = vsyncpa [#allocation4], 1

</llo_original>
